<compile_context>
chip_gen: v5e
topology: v5e:2x2
jax: 0.10.0
libtpu: 0.0.40
codegen_flags: <defaults>
</compile_context>

<pallas_src>
import functools
import math

import numpy as np
import jax
import jax.numpy as jnp
from jax.experimental import pallas as pl
from jax.experimental.pallas import tpu as pltpu


# --------------------------------------------------------------------------------------
# Rotation operator (parameter glue, trace-time numpy).
# TODO(synk): `rotation.MultiRotationOperatorMatrixSparse` was not provided with the
# module; a standard bilinear-interpolation planar-rotation operator (dense
# [O*k*k, k*k]) with optional disk mask is reimplemented here to play the same role.
# --------------------------------------------------------------------------------------
def multi_rotation_operator_matrix(ksize, n_orient, periodicity=2.0 * np.pi, disk_mask=True):
    c = (ksize - 1) / 2.0
    rad2 = (c + 0.5) ** 2
    mats = []
    for r in range(n_orient):
        theta = periodicity * r / n_orient
        ct, st = np.cos(theta), np.sin(theta)
        M = np.zeros((ksize * ksize, ksize * ksize), dtype=np.float32)
        for i in range(ksize):
            for j in range(ksize):
                y, x = i - c, j - c
                if disk_mask and (x * x + y * y) > rad2:
                    continue
                # inverse rotation -> source coordinate, bilinear interpolation
                xs = ct * x + st * y
                ys = -st * x + ct * y
                si, sj = ys + c, xs + c
                i0, j0 = int(np.floor(si)), int(np.floor(sj))
                di, dj = si - i0, sj - j0
                for ii, wi in ((i0, 1.0 - di), (i0 + 1, di)):
                    for jj, wj in ((j0, 1.0 - dj), (j0 + 1, dj)):
                        w = wi * wj
                        if w <= 0.0 or not (0 <= ii < ksize and 0 <= jj < ksize):
                            continue
                        if disk_mask and ((ii - c) ** 2 + (jj - c) ** 2) > rad2:
                            continue
                        M[i * ksize + j, ii * ksize + jj] += w
        mats.append(M)
    return np.concatenate(mats, axis=0)  # [O*k*k, k*k]


def rotate_gconv_kernels(kernel, rot_op):
    """Mirrors the torch rotate_gconv_kernels op-for-op.

    kernel: [O, Cout, Cin, kH, kW]  ->  [O, kH, kW, Cin, Cout, O]
    """
    O, Co, Ci, kH, kW = kernel.shape
    kernel_flat = jnp.reshape(kernel, (O * Ci * Co, kH * kW)).T          # [k*k, O*Co*Ci]
    k_rot = rot_op @ kernel_flat                                         # [O*k*k, O*Co*Ci]
    k_rot = jnp.reshape(k_rot, (O, kH, kW, O, Ci, Co))
    eye = np.identity(O, dtype=np.float32)
    outs = []
    for orientation in range(O):
        kt = jnp.transpose(k_rot[orientation], (0, 1, 3, 4, 2))          # [kH, kW, Ci, Co, O]
        kt = jnp.reshape(kt, (kH * kW * Ci * Co, O))
        roll = jnp.asarray(np.roll(eye, orientation, axis=1))
        kt = kt @ roll
        outs.append(jnp.reshape(kt, (kH, kW, Ci, Co, O)))
    return jnp.stack(outs, axis=0)


# --------------------------------------------------------------------------------------
# Pallas 'same' conv2d (the hot path), channel-major / lane-dense layout.
#   x   : [B, Cin, H*W]          (spatial flattened onto the lane axis)
#   w   : [Cout, KH*KW*Cin]
#   out : [B, Cout, H*W]
# --------------------------------------------------------------------------------------
def _tap_masks(H, W, KH, KW):
    """Per-tap validity masks [KH*KW, H*W] for the flattened-lane shift trick."""
    ph, pw = (KH - 1) // 2, (KW - 1) // 2
    hh, ww = np.meshgrid(np.arange(H), np.arange(W), indexing="ij")
    masks = np.zeros((KH * KW, H * W), np.float32)
    for i in range(KH):
        for j in range(KW):
            di, dj = i - ph, j - pw
            valid = ((hh + di >= 0) & (hh + di < H) &
                     (ww + dj >= 0) & (ww + dj < W))
            masks[i * KW + j] = valid.reshape(-1).astype(np.float32)
    return masks


def _gconv2d_kernel(x_ref, w_ref, m_ref, o_ref, xpad_ref, col_ref, *,
                    KH, KW, H, W, pad, compute_dtype):
    # x_ref  : [1, Cin, HW]        f32 activation block (one batch element)
    # w_ref  : [TCout, KK*Cin]     weight tile (bf16 or f32)
    # m_ref  : [KK, HW]            per-tap boundary masks (f32)
    # o_ref  : [1, TCout, HW]      output block (f32), HW lane-dense
    # xpad_ref : VMEM [Cin, HW+2*pad]  zero-padded flattened image
    # col_ref  : VMEM [KK*Cin, HW]     im2col matrix (persists across Cout tiles)
    Cin = x_ref.shape[1]
    HW = H * W
    ph, pw = (KH - 1) // 2, (KW - 1) // 2

    # Build the padded image + im2col scratch once per batch block; Cout tiles reuse it.
    @pl.when(pl.program_id(1) == 0)
    def _build_im2col():
        if pad:
            zeros = jnp.zeros((Cin, pad), jnp.float32)
            xpad_ref[:, pl.ds(0, pad)] = zeros
            xpad_ref[:, pl.ds(pad + HW, pad)] = zeros
        xpad_ref[:, pl.ds(pad, HW)] = x_ref[0]
        for i in range(KH):
            for j in range(KW):
                t = i * KW + j
                delta = (i - ph) * W + (j - pw)
                # Shifted window read from the zero-padded row (static lane offset),
                # masked at the W boundaries (row-wrap positions) — all f32 VPU math.
                shifted = xpad_ref[:, pl.ds(pad + delta, HW)]       # [Cin, HW]
                mask = m_ref[pl.ds(t, 1), :]                        # [1, HW]
                col_ref[pl.ds(t * Cin, Cin), :] = shifted * mask

    # One MXU matmul with K = KH*KW*Cin (bf16 operands on the fast path, f32 acc).
    acc = jnp.dot(w_ref[...], col_ref[...].astype(compute_dtype),
                  preferred_element_type=jnp.float32)               # [TCout, HW]
    o_ref[...] = acc.reshape(o_ref.shape).astype(o_ref.dtype)


def conv2d_same_pallas(x_nchw, w_oihw, *, use_bf16=True):
    """Cross-correlation, stride 1, 'same' padding (odd kernel). NCHW in/out."""
    B, Cin, H, W = map(int, x_nchw.shape)
    Cout, Cin_w, KH, KW = map(int, w_oihw.shape)
    assert Cin_w == Cin and KH % 2 == 1 and KW % 2 == 1
    HW = H * W
    KK = KH * KW
    compute_dtype = jnp.bfloat16 if use_bf16 else jnp.float32

    # Channel-major, lane-dense: spatial flattened onto lanes. No NHWC transpose and
    # no HBM padding pass — padding/shifting is fused into the kernel.
    x_flat = jnp.reshape(x_nchw, (B, Cin, HW)).astype(jnp.float32)
    # OIHW -> [Cout, KH, KW, Cin] -> [Cout, KK*Cin]; row order matches the im2col rows.
    w_flat = jnp.reshape(jnp.transpose(w_oihw, (0, 2, 3, 1)),
                         (Cout, KK * Cin)).astype(compute_dtype)
    masks = jnp.asarray(_tap_masks(H, W, KH, KW))                    # [KK, HW] f32

    halo = ((KH - 1) // 2) * W + (KW - 1) // 2
    pad = 0 if halo == 0 else ((halo + 127) // 128) * 128            # lane-aligned halo

    # Cout tiling keeps weight/output blocks bounded for large O*Cout.
    TCout = Cout if Cout <= 512 else 256
    n_co = pl.cdiv(Cout, TCout)
    # TODO(synk): for large H*W (v7x: 64 MiB VMEM) add a spatial grid axis with a
    # (KH-1)-row halo instead of holding the full image per batch block.

    kernel = functools.partial(_gconv2d_kernel, KH=KH, KW=KW, H=H, W=W, pad=pad,
                               compute_dtype=compute_dtype)
    cost = pl.CostEstimate(
        flops=2 * B * HW * KK * Cin * Cout,
        transcendentals=0,
        bytes_accessed=(B * Cin * HW * 4
                        + Cout * KK * Cin * (2 if use_bf16 else 4)
                        + KK * HW * 4
                        + B * Cout * HW * 4))

    out_flat = pl.pallas_call(
        kernel,
        out_shape=jax.ShapeDtypeStruct((B, Cout, HW), jnp.float32),
        grid=(B, n_co),
        in_specs=[
            pl.BlockSpec((1, Cin, HW), lambda b, co: (b, 0, 0)),
            pl.BlockSpec((TCout, KK * Cin), lambda b, co: (co, 0)),
            pl.BlockSpec((KK, HW), lambda b, co: (0, 0)),
        ],
        out_specs=pl.BlockSpec((1, TCout, HW), lambda b, co: (b, co, 0)),
        scratch_shapes=[
            pltpu.VMEM((Cin, HW + 2 * pad), jnp.float32),   # zero-padded image
            pltpu.VMEM((KK * Cin, HW), jnp.float32),        # im2col matrix
        ],
        compiler_params=pltpu.CompilerParams(
            dimension_semantics=("parallel", "arbitrary"),
            vmem_limit_bytes=48 * 1024 * 1024),
        cost_estimate=cost,
    )(x_flat, w_flat, masks)

    return jnp.reshape(out_flat, (B, Cout, H, W))


def conv2d_same_reference(x_nchw, w_oihw, *, use_bf16=True):
    cd = jnp.bfloat16 if use_bf16 else jnp.float32
    return jax.lax.conv_general_dilated(
        x_nchw.astype(cd), w_oihw.astype(cd), window_strides=(1, 1), padding="SAME",
        dimension_numbers=("NCHW", "OIHW", "NCHW"),
        preferred_element_type=jnp.float32)


# --------------------------------------------------------------------------------------
# gconv_block forward
# --------------------------------------------------------------------------------------
def gconv_block_forward(x, kernel, rot_op, conv_fn=conv2d_same_pallas):
    """x: [B, O, Cin, H, W], kernel: [O, Cout, Cin, k, k] -> [B, O, Cout, H, W]."""
    B, O, Ci, H, W = x.shape
    _, Co, _, kH, kW = kernel.shape
    kernel_stack = rotate_gconv_kernels(kernel, rot_op)                 # [O, kH, kW, Ci, Co, O]
    x2d = jnp.reshape(x, (B, O * Ci, H, W))
    k2d = jnp.transpose(kernel_stack, (1, 2, 3, 4, 0, 5))               # [kH, kW, Ci, Co, O, O]
    k2d = jnp.reshape(k2d, (kH, kW, O * Ci, O * Co))
    k2d = jnp.transpose(k2d, (3, 2, 0, 1))                              # [O*Co, O*Ci, kH, kW]
    y2d = conv_fn(x2d, k2d)                                             # [B, O*Co, H, W]
    return jnp.reshape(y2d, (B, O, Co, H, W))


if __name__ == "__main__":
    # Small, module-consistent shapes.
    B, O, Ci, Co, k, H, W = 2, 4, 2, 3, 3, 16, 16

    key = jax.random.PRNGKey(0)
    kkey, xkey = jax.random.split(key)
    std = math.sqrt(2.0 / (Ci * k * k))
    kernel = jax.random.normal(kkey, (O, Co, Ci, k, k), dtype=jnp.float32) * std
    x = jax.random.normal(xkey, (B, O, Ci, H, W), dtype=jnp.float32)

    rot_op = jnp.asarray(
        multi_rotation_operator_matrix(k, O, periodicity=2.0 * np.pi, disk_mask=True))

    # Fast path: bf16 MXU operands, f32 accumulation (native on v6e/v7x, fine on v5e).
    fwd_bf16 = jax.jit(functools.partial(
        gconv_block_forward, conv_fn=functools.partial(conv2d_same_pallas, use_bf16=True)))
    out = jax.block_until_ready(fwd_bf16(x, kernel, rot_op))
    assert out.shape == (B, O, Co, H, W), out.shape

    ref_bf16_fn = jax.jit(functools.partial(
        gconv_block_forward, conv_fn=functools.partial(conv2d_same_reference, use_bf16=True)))
    ref = jax.block_until_ready(ref_bf16_fn(x, kernel, rot_op))
    np.testing.assert_allclose(np.asarray(out), np.asarray(ref), rtol=5e-3, atol=5e-3)

    # Exact-semantics path: pure f32 (matches the PyTorch module's float32 conv).
    fwd_f32 = jax.jit(functools.partial(
        gconv_block_forward, conv_fn=functools.partial(conv2d_same_pallas, use_bf16=False)))
    ref_f32_fn = jax.jit(functools.partial(
        gconv_block_forward, conv_fn=functools.partial(conv2d_same_reference, use_bf16=False)))
    out32 = jax.block_until_ready(fwd_f32(x, kernel, rot_op))
    ref32 = jax.block_until_ready(ref_f32_fn(x, kernel, rot_op))
    np.testing.assert_allclose(np.asarray(out32), np.asarray(ref32), rtol=1e-4, atol=1e-4)

    print("KERNEL_OK")
</pallas_src>

<mosaic_0001>
module attributes {stable_mosaic.version = 11 : i64} {
  func.func @_gconv2d_kernel(%arg0: i32, %arg1: i32, %arg2: memref<1x8x256xf32, #tpu.memory_space<vmem>>, %arg3: memref<12x72xbf16, #tpu.memory_space<vmem>>, %arg4: memref<9x256xf32, #tpu.memory_space<vmem>>, %arg5: memref<1x12x256xf32, #tpu.memory_space<vmem>>, %arg6: memref<8x512xf32, #tpu.memory_space<vmem>>, %arg7: memref<72x256xf32, #tpu.memory_space<vmem>>) attributes {dimension_semantics = [#tpu.dimension_semantics<parallel>, #tpu.dimension_semantics<arbitrary>], iteration_bounds = array<i64: 2, 1>, scalar_prefetch = 0 : i64, scratch_operands = 2 : i64, tpu.core_type = #tpu.core_type<tc>, window_params = [{transform_indices = @transform_0, window_bounds = array<i64: 1, 8, 256>}, {transform_indices = @transform_1, window_bounds = array<i64: 12, 72>}, {pipeline_mode = #tpu.pipeline_mode<synchronous>, transform_indices = @transform_2, window_bounds = array<i64: 9, 256>}, {transform_indices = @transform_3, window_bounds = array<i64: 1, 12, 256>}]} {
    %c0_i32 = arith.constant 0 : i32
    %0 = arith.cmpi eq, %arg1, %c0_i32 : i32
    %1 = arith.extui %0 : i1 to i32
    %c0_i32_0 = arith.constant 0 : i32
    %2 = arith.cmpi ne, %1, %c0_i32_0 : i32
    scf.if %2 {
      %cst_7 = arith.constant 0.000000e+00 : f32
      %9 = vector.broadcast %cst_7 : f32 to vector<8x128xf32>
      %c0_8 = arith.constant 0 : index
      %c0_9 = arith.constant 0 : index
      %10 = vector.load %arg6[%c0_8, %c0_9] : memref<8x512xf32, #tpu.memory_space<vmem>>, vector<8x128xf32>
      tpu.vector_store %arg6[%c0_8, %c0_9], %9 {strides = array<i32>} : memref<8x512xf32, #tpu.memory_space<vmem>>, vector<8x128xf32>,
      %c0_10 = arith.constant 0 : index
      %c384 = arith.constant 384 : index
      %11 = vector.load %arg6[%c0_10, %c384] : memref<8x512xf32, #tpu.memory_space<vmem>>, vector<8x128xf32>
      tpu.vector_store %arg6[%c0_10, %c384], %9 {strides = array<i32>} : memref<8x512xf32, #tpu.memory_space<vmem>>, vector<8x128xf32>,
      %c0_11 = arith.constant 0 : index
      %c0_12 = arith.constant 0 : index
      %c0_13 = arith.constant 0 : index
      %12 = vector.load %arg2[%c0_11, %c0_12, %c0_13] : memref<1x8x256xf32, #tpu.memory_space<vmem>>, vector<1x8x256xf32>
      %13 = vector.shape_cast %12 : vector<1x8x256xf32> to vector<8x256xf32>
      %c0_14 = arith.constant 0 : index
      %c128 = arith.constant 128 : index
      %14 = vector.load %arg6[%c0_14, %c128] : memref<8x512xf32, #tpu.memory_space<vmem>>, vector<8x256xf32>
      tpu.vector_store %arg6[%c0_14, %c128], %13 {strides = array<i32>} : memref<8x512xf32, #tpu.memory_space<vmem>>, vector<8x256xf32>,
      %c0_15 = arith.constant 0 : index
      %c111 = arith.constant 111 : index
      %15 = vector.load %arg6[%c0_15, %c111] : memref<8x512xf32, #tpu.memory_space<vmem>>, vector<8x256xf32>
      %c0_16 = arith.constant 0 : index
      %c0_17 = arith.constant 0 : index
      %16 = vector.load %arg4[%c0_16, %c0_17] : memref<9x256xf32, #tpu.memory_space<vmem>>, vector<1x256xf32>
      %17 = vector.broadcast %16 : vector<1x256xf32> to vector<8x256xf32>
      %18 = arith.mulf %15, %17 : vector<8x256xf32>
      %c0_18 = arith.constant 0 : index
      %c0_19 = arith.constant 0 : index
      %19 = vector.load %arg7[%c0_18, %c0_19] : memref<72x256xf32, #tpu.memory_space<vmem>>, vector<8x256xf32>
      tpu.vector_store %arg7[%c0_18, %c0_19], %18 {strides = array<i32>} : memref<72x256xf32, #tpu.memory_space<vmem>>, vector<8x256xf32>,
      %c0_20 = arith.constant 0 : index
      %c112 = arith.constant 112 : index
      %20 = vector.load %arg6[%c0_20, %c112] : memref<8x512xf32, #tpu.memory_space<vmem>>, vector<8x256xf32>
      %c1 = arith.constant 1 : index
      %c0_21 = arith.constant 0 : index
      %21 = vector.load %arg4[%c1, %c0_21] : memref<9x256xf32, #tpu.memory_space<vmem>>, vector<1x256xf32>
      %22 = vector.broadcast %21 : vector<1x256xf32> to vector<8x256xf32>
      %23 = arith.mulf %20, %22 : vector<8x256xf32>
      %c8 = arith.constant 8 : index
      %c0_22 = arith.constant 0 : index
      %24 = vector.load %arg7[%c8, %c0_22] : memref<72x256xf32, #tpu.memory_space<vmem>>, vector<8x256xf32>
      tpu.vector_store %arg7[%c8, %c0_22], %23 {strides = array<i32>} : memref<72x256xf32, #tpu.memory_space<vmem>>, vector<8x256xf32>,
      %c0_23 = arith.constant 0 : index
      %c113 = arith.constant 113 : index
      %25 = vector.load %arg6[%c0_23, %c113] : memref<8x512xf32, #tpu.memory_space<vmem>>, vector<8x256xf32>
      %c2 = arith.constant 2 : index
      %c0_24 = arith.constant 0 : index
      %26 = vector.load %arg4[%c2, %c0_24] : memref<9x256xf32, #tpu.memory_space<vmem>>, vector<1x256xf32>
      %27 = vector.broadcast %26 : vector<1x256xf32> to vector<8x256xf32>
      %28 = arith.mulf %25, %27 : vector<8x256xf32>
      %c16 = arith.constant 16 : index
      %c0_25 = arith.constant 0 : index
      %29 = vector.load %arg7[%c16, %c0_25] : memref<72x256xf32, #tpu.memory_space<vmem>>, vector<8x256xf32>
      tpu.vector_store %arg7[%c16, %c0_25], %28 {strides = array<i32>} : memref<72x256xf32, #tpu.memory_space<vmem>>, vector<8x256xf32>,
      %c0_26 = arith.constant 0 : index
      %c127 = arith.constant 127 : index
      %30 = vector.load %arg6[%c0_26, %c127] : memref<8x512xf32, #tpu.memory_space<vmem>>, vector<8x256xf32>
      %c3 = arith.constant 3 : index
      %c0_27 = arith.constant 0 : index
      %31 = vector.load %arg4[%c3, %c0_27] : memref<9x256xf32, #tpu.memory_space<vmem>>, vector<1x256xf32>
      %32 = vector.broadcast %31 : vector<1x256xf32> to vector<8x256xf32>
      %33 = arith.mulf %30, %32 : vector<8x256xf32>
      %c24 = arith.constant 24 : index
      %c0_28 = arith.constant 0 : index
      %34 = vector.load %arg7[%c24, %c0_28] : memref<72x256xf32, #tpu.memory_space<vmem>>, vector<8x256xf32>
      tpu.vector_store %arg7[%c24, %c0_28], %33 {strides = array<i32>} : memref<72x256xf32, #tpu.memory_space<vmem>>, vector<8x256xf32>,
      %c0_29 = arith.constant 0 : index
      %c128_30 = arith.constant 128 : index
      %35 = vector.load %arg6[%c0_29, %c128_30] : memref<8x512xf32, #tpu.memory_space<vmem>>, vector<8x256xf32>
      %c4 = arith.constant 4 : index
      %c0_31 = arith.constant 0 : index
      %36 = vector.load %arg4[%c4, %c0_31] : memref<9x256xf32, #tpu.memory_space<vmem>>, vector<1x256xf32>
      %37 = vector.broadcast %36 : vector<1x256xf32> to vector<8x256xf32>
      %38 = arith.mulf %35, %37 : vector<8x256xf32>
      %c32 = arith.constant 32 : index
      %c0_32 = arith.constant 0 : index
      %39 = vector.load %arg7[%c32, %c0_32] : memref<72x256xf32, #tpu.memory_space<vmem>>, vector<8x256xf32>
      tpu.vector_store %arg7[%c32, %c0_32], %38 {strides = array<i32>} : memref<72x256xf32, #tpu.memory_space<vmem>>, vector<8x256xf32>,
      %c0_33 = arith.constant 0 : index
      %c129 = arith.constant 129 : index
      %40 = vector.load %arg6[%c0_33, %c129] : memref<8x512xf32, #tpu.memory_space<vmem>>, vector<8x256xf32>
      %c5 = arith.constant 5 : index
      %c0_34 = arith.constant 0 : index
      %41 = vector.load %arg4[%c5, %c0_34] : memref<9x256xf32, #tpu.memory_space<vmem>>, vector<1x256xf32>
      %42 = vector.broadcast %41 : vector<1x256xf32> to vector<8x256xf32>
      %43 = arith.mulf %40, %42 : vector<8x256xf32>
      %c40 = arith.constant 40 : index
      %c0_35 = arith.constant 0 : index
      %44 = vector.load %arg7[%c40, %c0_35] : memref<72x256xf32, #tpu.memory_space<vmem>>, vector<8x256xf32>
      tpu.vector_store %arg7[%c40, %c0_35], %43 {strides = array<i32>} : memref<72x256xf32, #tpu.memory_space<vmem>>, vector<8x256xf32>,
      %c0_36 = arith.constant 0 : index
      %c143 = arith.constant 143 : index
      %45 = vector.load %arg6[%c0_36, %c143] : memref<8x512xf32, #tpu.memory_space<vmem>>, vector<8x256xf32>
      %c6 = arith.constant 6 : index
      %c0_37 = arith.constant 0 : index
      %46 = vector.load %arg4[%c6, %c0_37] : memref<9x256xf32, #tpu.memory_space<vmem>>, vector<1x256xf32>
      %47 = vector.broadcast %46 : vector<1x256xf32> to vector<8x256xf32>
      %48 = arith.mulf %45, %47 : vector<8x256xf32>
      %c48 = arith.constant 48 : index
      %c0_38 = arith.constant 0 : index
      %49 = vector.load %arg7[%c48, %c0_38] : memref<72x256xf32, #tpu.memory_space<vmem>>, vector<8x256xf32>
      tpu.vector_store %arg7[%c48, %c0_38], %48 {strides = array<i32>} : memref<72x256xf32, #tpu.memory_space<vmem>>, vector<8x256xf32>,
      %c0_39 = arith.constant 0 : index
      %c144 = arith.constant 144 : index
      %50 = vector.load %arg6[%c0_39, %c144] : memref<8x512xf32, #tpu.memory_space<vmem>>, vector<8x256xf32>
      %c7 = arith.constant 7 : index
      %c0_40 = arith.constant 0 : index
      %51 = vector.load %arg4[%c7, %c0_40] : memref<9x256xf32, #tpu.memory_space<vmem>>, vector<1x256xf32>
      %52 = vector.broadcast %51 : vector<1x256xf32> to vector<8x256xf32>
      %53 = arith.mulf %50, %52 : vector<8x256xf32>
      %c56 = arith.constant 56 : index
      %c0_41 = arith.constant 0 : index
      %54 = vector.load %arg7[%c56, %c0_41] : memref<72x256xf32, #tpu.memory_space<vmem>>, vector<8x256xf32>
      tpu.vector_store %arg7[%c56, %c0_41], %53 {strides = array<i32>} : memref<72x256xf32, #tpu.memory_space<vmem>>, vector<8x256xf32>,
      %c0_42 = arith.constant 0 : index
      %c145 = arith.constant 145 : index
      %55 = vector.load %arg6[%c0_42, %c145] : memref<8x512xf32, #tpu.memory_space<vmem>>, vector<8x256xf32>
      %c8_43 = arith.constant 8 : index
      %c0_44 = arith.constant 0 : index
      %56 = vector.load %arg4[%c8_43, %c0_44] : memref<9x256xf32, #tpu.memory_space<vmem>>, vector<1x256xf32>
      %57 = vector.broadcast %56 : vector<1x256xf32> to vector<8x256xf32>
      %58 = arith.mulf %55, %57 : vector<8x256xf32>
      %c64 = arith.constant 64 : index
      %c0_45 = arith.constant 0 : index
      %59 = vector.load %arg7[%c64, %c0_45] : memref<72x256xf32, #tpu.memory_space<vmem>>, vector<8x256xf32>
      tpu.vector_store %arg7[%c64, %c0_45], %58 {strides = array<i32>} : memref<72x256xf32, #tpu.memory_space<vmem>>, vector<8x256xf32>,
    } else {
    }
    %c0 = arith.constant 0 : index
    %c0_1 = arith.constant 0 : index
    %3 = vector.load %arg3[%c0, %c0_1] : memref<12x72xbf16, #tpu.memory_space<vmem>>, vector<12x72xbf16>
    %c0_2 = arith.constant 0 : index
    %c0_3 = arith.constant 0 : index
    %4 = vector.load %arg7[%c0_2, %c0_3] : memref<72x256xf32, #tpu.memory_space<vmem>>, vector<72x256xf32>
    %5 = arith.truncf %4 : vector<72x256xf32> to vector<72x256xbf16>
    %cst = arith.constant dense<0.000000e+00> : vector<12x256xf32>
    %6 = tpu.matmul %3, %5, %cst {dimension_numbers = #tpu.dot_dimension_numbers<[1], [0], [0], [1], [0, 0, 1, 1], [], []>} : vector<12x72xbf16>, vector<72x256xbf16>, vector<12x256xf32> -> vector<12x256xf32>
    %7 = vector.shape_cast %6 : vector<12x256xf32> to vector<1x12x256xf32>
    %c0_4 = arith.constant 0 : index
    %c0_5 = arith.constant 0 : index
    %c0_6 = arith.constant 0 : index
    %8 = vector.load %arg5[%c0_4, %c0_5, %c0_6] : memref<1x12x256xf32, #tpu.memory_space<vmem>>, vector<1x12x256xf32>
    tpu.vector_store %arg5[%c0_4, %c0_5, %c0_6], %7 {strides = array<i32>} : memref<1x12x256xf32, #tpu.memory_space<vmem>>, vector<1x12x256xf32>,
    return
  }
  func.func @transform_0(%arg0: i32, %arg1: i32) -> (i32, i32, i32) {
    %c0_i32 = arith.constant 0 : i32
    %c0_i32_0 = arith.constant 0 : i32
    %c0_i32_1 = arith.constant 0 : i32
    return %arg0, %c0_i32, %c0_i32_0 : i32, i32, i32
  }
  func.func @transform_1(%arg0: i32, %arg1: i32) -> (i32, i32) {
    %c0_i32 = arith.constant 0 : i32
    %c0_i32_0 = arith.constant 0 : i32
    return %arg1, %c0_i32 : i32, i32
  }
  func.func @transform_2(%arg0: i32, %arg1: i32) -> (i32, i32) {
    %c0_i32 = arith.constant 0 : i32
    %c0_i32_0 = arith.constant 0 : i32
    %c0_i32_1 = arith.constant 0 : i32
    return %c0_i32, %c0_i32_0 : i32, i32
  }
  func.func @transform_3(%arg0: i32, %arg1: i32) -> (i32, i32, i32) {
    %c0_i32 = arith.constant 0 : i32
    %c0_i32_0 = arith.constant 0 : i32
    return %arg0, %arg1, %c0_i32 : i32, i32, i32
  }
}

</mosaic_0001>

<llo_original>
// kernel: gconv_block_forward.1
$region0: #{gconv_block_forward.1}
  #allocation0 [shape = 'u32[]', space=smem, size = 0x4, offset = 0x4, fixed_abs, tag = 'smem constant byte address 0x4 - core index']
  #allocation1 [shape = 'u32[72,128]{1,0:T(1,128)}', space=vmem, size = 0x9000, scoped, tag = 'internal scratch']
  #allocation2 [shape = 'f32[8,512]{1,0:T(8,128)}', space=vmem, size = 0x4000, scoped, tag = 'scratch operand']
  #allocation3 [shape = 'f32[72,256]{1,0:T(8,128)}', space=vmem, size = 0x12000, scoped, tag = 'scratch operand']
  %s0 = inlined_call_operand.vmem [shape: f32[2,8,256], index: 0, kind: input, shape index: {}]
  %s1 = inlined_call_operand.vmem [shape: bf16[12,72], index: 1, kind: input, shape index: {}]
  %s2 = inlined_call_operand.vmem [shape: f32[9,256], index: 2, kind: input, shape index: {}]
  %s3 = inlined_call_operand.vmem [shape: f32[2,12,256], index: 3, kind: output, shape index: {}]
  %s4 = sld [smem:[#allocation0]]
  $region49: #{gconv_block_forward.1} parent=0
    _
  %s6 = ssub.s32 1, %s4
  %s7 = scalar_select 0, %s6, %s4
  loop: start=0, step=1, limit=4
  $region2: #{gconv_block_forward.1} parent=0 // loop_pre_header
    _
  $region3: #{gconv_block_forward.1} parent=0 // loop_header
    %s9 = sphi 0, %s13
    %p10 = scmp.ge.s32.totalorder %s9, 4
    %s16 = sphi 0, %s28
    %s17 = sphi 0, %s24
    %s18 = sphi 0, %s16
    %s19 = sphi 0, %s17
    %s20 = sphi 0, %s18
    %s21 = sphi 0, %s19
    %s31 = sphi 0, %s33
    %s34 = sphi 0, %s31
    %s35 = sphi 0, %s34
    %s51 = sphi 0, %s35
    %s57 = sphi 0, %s59
    %s60 = sphi 0, %s57
    %s61 = sphi 0, %s60
    %s77 = sphi 0, %s61
    %s81 = sphi 0, %s81
    %s83 = sphi 0, %s81
    %s84 = sphi 0, %s83
    %s98 = sphi 0, %s84
    %s106 = sphi 0, %s108
    %s109 = sphi 0, %s106
    %s110 = sphi 0, %s109
    %s126 = sphi 0, %s110
  $region4: #{gconv_block_forward.1} parent=0 // loop_header_branch
    %12 = sbr.rel (%p10) target = $region8
  $region5: #{gconv_block_forward.1} parent=0 // loop_body
    %s14 = ssub.s32 %s9, 1
    %s15 = ssub.s32 %s9, 2
    %s22 = sadd.s32 1, %s17
    %p23 = scmp.ge.s32.totalorder %s22, 1
    %s24 = scalar_select %p23, 0, %s22
    %s25 = sadd.s32 1, %s16
    %s26 = scalar_select %p23, %s25, %s16
    %p27 = scmp.ge.s32.totalorder %s26, 2
    %s28 = scalar_select %p27, 0, %s26
    %s29 = ssub.s32 %s16, %s28
    %p30 = scmp.eq.s32.totalorder %s29, 0
    %s32 = sadd.s32 %s31, 1
    %s33 = scalar_select %p30, %s31, %s32
    %p36 = pneg %p30
    %p37 = scmp.eq.s32.totalorder %s9, 1
    %p38 = por %p36, %p37
    %p39 = scmp.ne.s32.totalorder %s31, %s34
    %p40 = scmp.eq.s32.totalorder %s9, 0
    %p41 = por %p39, %p40
    %p42 = scmp.ne.s32.totalorder %s31, %s34
    %p43 = scmp.eq.s32.totalorder %s14, 1
    %p44 = por %p42, %p43
    %p45 = scmp.ne.s32.totalorder %s34, %s35
    %p46 = scmp.eq.s32.totalorder %s14, 0
    %p47 = por %p45, %p46
    %p48 = scmp.ne.s32.totalorder %s34, %s35
    %p49 = scmp.eq.s32.totalorder %s15, 1
    %p50 = por %p48, %p49
    %p52 = scmp.ne.s32.totalorder %s35, %s51
    %p53 = scmp.eq.s32.totalorder %s15, 0
    %p54 = por %p52, %p53
    %s55 = ssub.s32 %s17, %s24
    %p56 = scmp.eq.s32.totalorder %s55, 0
    %s58 = sadd.s32 %s57, 1
    %s59 = scalar_select %p56, %s57, %s58
    %p62 = pneg %p56
    %p63 = scmp.eq.s32.totalorder %s9, 1
    %p64 = por %p62, %p63
    %p65 = scmp.ne.s32.totalorder %s57, %s60
    %p66 = scmp.eq.s32.totalorder %s9, 0
    %p67 = por %p65, %p66
    %p68 = scmp.ne.s32.totalorder %s57, %s60
    %p69 = scmp.eq.s32.totalorder %s14, 1
    %p70 = por %p68, %p69
    %p71 = scmp.ne.s32.totalorder %s60, %s61
    %p72 = scmp.eq.s32.totalorder %s14, 0
    %p73 = por %p71, %p72
    %p74 = scmp.ne.s32.totalorder %s60, %s61
    %p75 = scmp.eq.s32.totalorder %s15, 1
    %p76 = por %p74, %p75
    %p78 = scmp.ne.s32.totalorder %s61, %s77
    %p79 = scmp.eq.s32.totalorder %s15, 0
    %p80 = por %p78, %p79
    %s82 = sadd.s32 %s81, 1
    %p85 = scmp.eq.s32.totalorder %s9, 1
    %p86 = scmp.ne.s32.totalorder %s81, %s83
    %p87 = scmp.eq.s32.totalorder %s9, 0
    %p88 = por %p86, %p87
    %p89 = scmp.ne.s32.totalorder %s81, %s83
    %p90 = scmp.eq.s32.totalorder %s14, 1
    %p91 = por %p89, %p90
    %p92 = scmp.ne.s32.totalorder %s83, %s84
    %p93 = scmp.eq.s32.totalorder %s14, 0
    %p94 = por %p92, %p93
    %p95 = scmp.ne.s32.totalorder %s83, %s84
    %p96 = scmp.eq.s32.totalorder %s15, 1
    %p97 = por %p95, %p96
    %p99 = scmp.ne.s32.totalorder %s84, %s98
    %p100 = scmp.eq.s32.totalorder %s15, 0
    %p101 = por %p99, %p100
    %s102 = ssub.s32 %s16, %s28
    %s103 = ssub.s32 %s17, %s24
    %s104 = sor.u32 %s102, %s103
    %p105 = scmp.eq.s32.totalorder %s104, 0
    %s107 = sadd.s32 %s106, 1
    %s108 = scalar_select %p105, %s106, %s107
    %p111 = pneg %p105
    %p112 = scmp.eq.s32.totalorder %s9, 1
    %p113 = por %p111, %p112
    %p114 = scmp.ne.s32.totalorder %s106, %s109
    %p115 = scmp.eq.s32.totalorder %s9, 0
    %p116 = por %p114, %p115
    %p117 = scmp.ne.s32.totalorder %s106, %s109
    %p118 = scmp.eq.s32.totalorder %s14, 1
    %p119 = por %p117, %p118
    %p120 = scmp.ne.s32.totalorder %s109, %s110
    %p121 = scmp.eq.s32.totalorder %s14, 0
    %p122 = por %p120, %p121
    %p123 = scmp.ne.s32.totalorder %s109, %s110
    %p124 = scmp.eq.s32.totalorder %s15, 1
    %p125 = por %p123, %p124
    %p127 = scmp.ne.s32.totalorder %s110, %s126
    %p128 = scmp.eq.s32.totalorder %s15, 0
    %p129 = por %p127, %p128
    %p130 = scmp.le.s32.totalorder 1, %s9
    %p131 = scmp.lt.s32.totalorder %s9, 3
    %p132 = pnand %p130, %p131
    %p133 = pneg %p132
    // Predicated region
    $region9: #{gconv_block_forward.1} parent=5 // pred_check
      _
    $region10: #{gconv_block_forward.1} parent=5 // pred_check_branch
      %135 = sbr.rel (%p132) target = $region12
    $region11: #{gconv_block_forward.1} parent=5 // pred_region
      %s136 = ssub.s32 %s9, 1
      // Predicated region
      $region13: #{gconv_block_forward.1} parent=11 // pred_check
        %p137 = pneg %p73
      $region14: #{gconv_block_forward.1} parent=11 // pred_check_branch
        %139 = sbr.rel (%p137) target = $region16
      $region15: #{gconv_block_forward.1} parent=11 // pred_region
        %s140 = smul.u32 2, %s19
        %p141 = scmp.lt.s32.totalorder %s140, 1
        %s142 = scalar_select %p141, %s140, 1
        %s143 = smul.addr %s142, 4
        %s144 = scalar_lea.vmem %s1, %s143
        %s145 = smul.u32 2, %s19
      $region16: #{gconv_block_forward.1} parent=11 // pred_fallthru
        _
      // Predicated region
      $region17: #{gconv_block_forward.1} parent=11 // pred_check
        %p146 = pneg %p94
      $region18: #{gconv_block_forward.1} parent=11 // pred_check_branch
        %148 = sbr.rel (%p146) target = $region20
      $region19: #{gconv_block_forward.1} parent=11 // pred_region
        _
      $region20: #{gconv_block_forward.1} parent=11 // pred_fallthru
        _
    $region12: #{gconv_block_forward.1} parent=5 // pred_fallthru
      _
    %p149 = scmp.lt.s32.totalorder %s9, 2
    // Predicated region
    $region21: #{gconv_block_forward.1} parent=5 // pred_check
      %p150 = pneg %p149
    $region22: #{gconv_block_forward.1} parent=5 // pred_check_branch
      %152 = sbr.rel (%p150) target = $region24
    $region23: #{gconv_block_forward.1} parent=5 // pred_region
      // Predicated region
      $region25: #{gconv_block_forward.1} parent=23 // pred_check
        %p153 = pneg %p41
      $region26: #{gconv_block_forward.1} parent=23 // pred_check_branch
        %155 = sbr.rel (%p153) target = $region28
      $region27: #{gconv_block_forward.1} parent=23 // pred_region
        %p156 = scmp.lt.s32.totalorder %s16, 1
        %s157 = scalar_select %p156, %s16, 1
        %s158 = smul.addr %s157, 2
        %s159 = smul.addr %s158, 8
        %s160 = scalar_lea.vmem %s0, %s159
      $region28: #{gconv_block_forward.1} parent=23 // pred_fallthru
        _
    $region24: #{gconv_block_forward.1} parent=5 // pred_fallthru
      _
    %p161 = scmp.le.s32.totalorder 1, %s9
    %p162 = scmp.lt.s32.totalorder %s9, 3
    %p163 = pnand %p161, %p162
    %p164 = pneg %p163
    // Predicated region
    $region29: #{gconv_block_forward.1} parent=5 // pred_check
      _
    $region30: #{gconv_block_forward.1} parent=5 // pred_check_branch
      %166 = sbr.rel (%p163) target = $region32
    $region31: #{gconv_block_forward.1} parent=5 // pred_region
      %s167 = ssub.s32 %s9, 1
      %p168 = scmp.lt.s32.totalorder %s18, 1
      %s169 = scalar_select %p168, %s18, 1
      %s170 = smul.addr %s169, 2
      %s171 = smul.addr %s170, 8
      %s172 = scalar_lea.vmem %s0, %s171
      %p173 = pneg %p47
      %p174 = pneg %p44
      %s175 = smul.u32 2, %s19
      %p176 = scmp.lt.s32.totalorder %s175, 1
      %s177 = scalar_select %p176, %s175, 1
      %s178 = smul.addr %s177, 4
      %s179 = scalar_lea.vmem %s1, %s178
      %p180 = pneg %p73
      %p181 = pneg %p70
      %p182 = pneg %p94
      %p183 = pneg %p91
      %p184 = pneg %p122
      %p185 = pneg %p119
      %s186 = smul.u32 2, %s19
      %p187 = scmp.lt.s32.totalorder %s18, 1
      %s188 = scalar_select %p187, %s18, 1
      %p189 = scmp.lt.s32.totalorder %s186, 1
      %s190 = scalar_select %p189, %s186, 1
      %s191 = smul.addr %s190, 2
      %s192 = smul.addr %s188, 4
      %s193 = sadd.s32 %s191, %s192
      %s194 = smul.addr %s193, 8
      %s195 = scalar_lea.vmem %s3, %s194
      %p196 = scmp.lt.s32.totalorder %s18, 1
      %s197 = scalar_select %p196, %s18, 1
      %s198 = smul.addr %s197, 2
      %s199 = smul.addr %s198, 8
      %s200 = scalar_lea.vmem %s0, %s199
      %s201 = smul.u32 2, %s19
      %p202 = scmp.lt.s32.totalorder %s201, 1
      %s203 = scalar_select %p202, %s201, 1
      %s204 = smul.addr %s203, 4
      %s205 = scalar_lea.vmem %s1, %s204
      %s206 = smul.u32 2, %s19
      %s207 = smul.u32 2, %s19
      %p208 = scmp.lt.s32.totalorder %s18, 1
      %s209 = scalar_select %p208, %s18, 1
      %p210 = scmp.lt.s32.totalorder %s207, 1
      %s211 = scalar_select %p210, %s207, 1
      %s212 = smul.addr %s211, 2
      %s213 = smul.addr %s209, 4
      %s214 = sadd.s32 %s212, %s213
      %s215 = smul.addr %s214, 8
      %s216 = scalar_lea.vmem %s3, %s215
      %s217 = smul.u32 2, %s19
      %p219 = scmp.eq.s32.totalorder %s19, 0
      // Predicated region
      $region33: #{gconv_block_forward.1} parent=31 // pred_check
        %p220 = pneg %p219
      $region34: #{gconv_block_forward.1} parent=31 // pred_check_branch
        %222 = sbr.rel (%p220) target = $region36
      $region35: #{gconv_block_forward.1} parent=31 // pred_region
        %223 = vst [vmem:[#allocation2] sm:$0xff] 0.0
        %224 = vst [vmem:[#allocation2 + $0x18] sm:$0xff] 0.0
        %v225 = vld [vmem:[%s200] sm:$0xff]
        %v226 = vld [vmem:[%s200 + $0x8] sm:$0xff]
        %227 = vst [vmem:[#allocation2 + $0x8] sm:$0xff] %v225
        %228 = vst [vmem:[#allocation2 + $0x10] sm:$0xff] %v226
        %v229 = vld [vmem:[#allocation2] sm:$0xff]
        %v230 = vld [vmem:[#allocation2 + $0x8] sm:$0xff]
        %v231 = vld [vmem:[#allocation2 + $0x10] sm:$0xff]
        %v232 = vld [vmem:[%s2] ss:$8 sm:$0x3]
        %v234 = vperm.slane %v232, 0
        %v235 = vperm.slane %v232, 1
        %236 = vrot.lane.b32.xlu0 %v234, 111
        %v237 = vpop.permute.xlu0 %236
        %238 = vrot.lane.b32.xlu0 %v235, 111
        %v239 = vpop.permute.xlu0 %238
        %vm240 = vcmask 908288
        %v241 = vsel %vm240, %v237, %v239
        %v245 = vmul.f32 %v229, %v237
        %v246 = vmul.f32 %v230, %v241
        %v247 = vmul.f32 %v231, %v239
        %251 = vrot.lane.b32.xlu0 %v245, 17
        %v252 = vpop.permute.xlu0 %251
        %253 = vrot.lane.b32.xlu0 %v246, 17
        %v254 = vpop.permute.xlu0 %253
        %255 = vrot.lane.b32.xlu0 %v247, 17
        %v256 = vpop.permute.xlu0 %255
        %vm257 = vcmask 138240
        %v258 = vsel %vm257, %v252, %v254
        %v259 = vsel %vm257, %v254, %v256
        %262 = vst [vmem:[#allocation3] sm:$0xff] %v258
        %263 = vst [vmem:[#allocation3 + $0x8] sm:$0xff] %v259
        %v264 = vld [vmem:[#allocation2] sm:$0xff]
        %v265 = vld [vmem:[#allocation2 + $0x8] sm:$0xff]
        %v266 = vld [vmem:[#allocation2 + $0x10] sm:$0xff]
        %s267 = scalar_lea.vmem %s2, 1
        %v268 = vld [vmem:[%s267] ss:$8 sm:$0x3]
        %v270 = vperm.slane %v268, 0
        %v271 = vperm.slane %v268, 1
        %272 = vrot.lane.b32.xlu0 %v270, 112
        %v273 = vpop.permute.xlu0 %272
        %274 = vrot.lane.b32.xlu0 %v271, 112
        %v275 = vpop.permute.xlu0 %274
        %vm276 = vcmask 916480
        %v277 = vsel %vm276, %v273, %v275
        %v281 = vmul.f32 %v264, %v273
        %v282 = vmul.f32 %v265, %v277
        %v283 = vmul.f32 %v266, %v275
        %287 = vrot.lane.b32.xlu0 %v281, 16
        %v288 = vpop.permute.xlu0 %287
        %289 = vrot.lane.b32.xlu0 %v282, 16
        %v290 = vpop.permute.xlu0 %289
        %291 = vrot.lane.b32.xlu0 %v283, 16
        %v292 = vpop.permute.xlu0 %291
        %vm293 = vcmask 130048
        %v294 = vsel %vm293, %v288, %v290
        %v295 = vsel %vm293, %v290, %v292
        %298 = vst [vmem:[#allocation3 + $0x10] sm:$0xff] %v294
        %299 = vst [vmem:[#allocation3 + $0x18] sm:$0xff] %v295
        %v300 = vld [vmem:[#allocation2] sm:$0xff]
        %v301 = vld [vmem:[#allocation2 + $0x8] sm:$0xff]
        %v302 = vld [vmem:[#allocation2 + $0x10] sm:$0xff]
        %s303 = scalar_lea.vmem %s2, 2
        %v304 = vld [vmem:[%s303] ss:$8 sm:$0x3]
        %v306 = vperm.slane %v304, 0
        %v307 = vperm.slane %v304, 1
        %308 = vrot.lane.b32.xlu0 %v306, 113
        %v309 = vpop.permute.xlu0 %308
        %310 = vrot.lane.b32.xlu0 %v307, 113
        %v311 = vpop.permute.xlu0 %310
        %vm312 = vcmask 924672
        %v313 = vsel %vm312, %v309, %v311
        %v317 = vmul.f32 %v300, %v309
        %v318 = vmul.f32 %v301, %v313
        %v319 = vmul.f32 %v302, %v311
        %323 = vrot.lane.b32.xlu0 %v317, 15
        %v324 = vpop.permute.xlu0 %323
        %325 = vrot.lane.b32.xlu0 %v318, 15
        %v326 = vpop.permute.xlu0 %325
        %327 = vrot.lane.b32.xlu0 %v319, 15
        %v328 = vpop.permute.xlu0 %327
        %vm329 = vcmask 121856
        %v330 = vsel %vm329, %v324, %v326
        %v331 = vsel %vm329, %v326, %v328
        %334 = vst [vmem:[#allocation3 + $0x20] sm:$0xff] %v330
        %335 = vst [vmem:[#allocation3 + $0x28] sm:$0xff] %v331
        %v336 = vld [vmem:[#allocation2] sm:$0xff]
        %v337 = vld [vmem:[#allocation2 + $0x8] sm:$0xff]
        %v338 = vld [vmem:[#allocation2 + $0x10] sm:$0xff]
        %s339 = scalar_lea.vmem %s2, 3
        %v340 = vld [vmem:[%s339] ss:$8 sm:$0x3]
        %v342 = vperm.slane %v340, 0
        %v343 = vperm.slane %v340, 1
        %344 = vrot.lane.b32.xlu0 %v342, 127
        %v345 = vpop.permute.xlu0 %344
        %346 = vrot.lane.b32.xlu0 %v343, 127
        %v347 = vpop.permute.xlu0 %346
        %vm348 = vcmask 1039360
        %v349 = vsel %vm348, %v345, %v347
        %v353 = vmul.f32 %v336, %v345
        %v354 = vmul.f32 %v337, %v349
        %v355 = vmul.f32 %v338, %v347
        %359 = vrot.lane.b32.xlu0 %v353, 1
        %v360 = vpop.permute.xlu0 %359
        %361 = vrot.lane.b32.xlu0 %v354, 1
        %v362 = vpop.permute.xlu0 %361
        %363 = vrot.lane.b32.xlu0 %v355, 1
        %v364 = vpop.permute.xlu0 %363
        %vm365 = vcmask 7168
        %v366 = vsel %vm365, %v360, %v362
        %v367 = vsel %vm365, %v362, %v364
        %370 = vst [vmem:[#allocation3 + $0x30] sm:$0xff] %v366
        %371 = vst [vmem:[#allocation3 + $0x38] sm:$0xff] %v367
        %v372 = vld [vmem:[#allocation2 + $0x8] sm:$0xff]
        %v373 = vld [vmem:[#allocation2 + $0x10] sm:$0xff]
        %s374 = scalar_lea.vmem %s2, 4
        %v375 = vld [vmem:[%s374] ss:$8 sm:$0x3]
        %v377 = vperm.slane %v375, 0
        %v378 = vperm.slane %v375, 1
        %v381 = vmul.f32 %v372, %v377
        %v382 = vmul.f32 %v373, %v378
        %383 = vst [vmem:[#allocation3 + $0x40] sm:$0xff] %v381
        %384 = vst [vmem:[#allocation3 + $0x48] sm:$0xff] %v382
        %v385 = vld [vmem:[#allocation2 + $0x8] sm:$0xff]
        %v386 = vld [vmem:[#allocation2 + $0x10] sm:$0xff]
        %v387 = vld [vmem:[#allocation2 + $0x18] sm:$0xff]
        %s388 = scalar_lea.vmem %s2, 5
        %v389 = vld [vmem:[%s388] ss:$8 sm:$0x3]
        %v391 = vperm.slane %v389, 0
        %v392 = vperm.slane %v389, 1
        %393 = vrot.lane.b32.xlu0 %v391, 1
        %v394 = vpop.permute.xlu0 %393
        %395 = vrot.lane.b32.xlu0 %v392, 1
        %v396 = vpop.permute.xlu0 %395
        %v397 = vsel %vm365, %v394, %v396
        %v401 = vmul.f32 %v385, %v394
        %v402 = vmul.f32 %v386, %v397
        %v403 = vmul.f32 %v387, %v396
        %407 = vrot.lane.b32.xlu0 %v401, 127
        %v408 = vpop.permute.xlu0 %407
        %409 = vrot.lane.b32.xlu0 %v402, 127
        %v410 = vpop.permute.xlu0 %409
        %411 = vrot.lane.b32.xlu0 %v403, 127
        %v412 = vpop.permute.xlu0 %411
        %v413 = vsel %vm348, %v408, %v410
        %v414 = vsel %vm348, %v410, %v412
        %417 = vst [vmem:[#allocation3 + $0x50] sm:$0xff] %v413
        %418 = vst [vmem:[#allocation3 + $0x58] sm:$0xff] %v414
        %v419 = vld [vmem:[#allocation2 + $0x8] sm:$0xff]
        %v420 = vld [vmem:[#allocation2 + $0x10] sm:$0xff]
        %v421 = vld [vmem:[#allocation2 + $0x18] sm:$0xff]
        %s422 = scalar_lea.vmem %s2, 6
        %v423 = vld [vmem:[%s422] ss:$8 sm:$0x3]
        %v425 = vperm.slane %v423, 0
        %v426 = vperm.slane %v423, 1
        %427 = vrot.lane.b32.xlu0 %v425, 15
        %v428 = vpop.permute.xlu0 %427
        %429 = vrot.lane.b32.xlu0 %v426, 15
        %v430 = vpop.permute.xlu0 %429
        %v431 = vsel %vm329, %v428, %v430
        %v435 = vmul.f32 %v419, %v428
        %v436 = vmul.f32 %v420, %v431
        %v437 = vmul.f32 %v421, %v430
        %441 = vrot.lane.b32.xlu0 %v435, 113
        %v442 = vpop.permute.xlu0 %441
        %443 = vrot.lane.b32.xlu0 %v436, 113
        %v444 = vpop.permute.xlu0 %443
        %445 = vrot.lane.b32.xlu0 %v437, 113
        %v446 = vpop.permute.xlu0 %445
        %v447 = vsel %vm312, %v442, %v444
        %v448 = vsel %vm312, %v444, %v446
        %451 = vst [vmem:[#allocation3 + $0x60] sm:$0xff] %v447
        %452 = vst [vmem:[#allocation3 + $0x68] sm:$0xff] %v448
        %v453 = vld [vmem:[#allocation2 + $0x8] sm:$0xff]
        %v454 = vld [vmem:[#allocation2 + $0x10] sm:$0xff]
        %v455 = vld [vmem:[#allocation2 + $0x18] sm:$0xff]
        %s456 = scalar_lea.vmem %s2, 7
        %v457 = vld [vmem:[%s456] ss:$8 sm:$0x3]
        %v459 = vperm.slane %v457, 0
        %v460 = vperm.slane %v457, 1
        %461 = vrot.lane.b32.xlu0 %v459, 16
        %v462 = vpop.permute.xlu0 %461
        %463 = vrot.lane.b32.xlu0 %v460, 16
        %v464 = vpop.permute.xlu0 %463
        %v465 = vsel %vm293, %v462, %v464
        %v469 = vmul.f32 %v453, %v462
        %v470 = vmul.f32 %v454, %v465
        %v471 = vmul.f32 %v455, %v464
        %475 = vrot.lane.b32.xlu0 %v469, 112
        %v476 = vpop.permute.xlu0 %475
        %477 = vrot.lane.b32.xlu0 %v470, 112
        %v478 = vpop.permute.xlu0 %477
        %479 = vrot.lane.b32.xlu0 %v471, 112
        %v480 = vpop.permute.xlu0 %479
        %v481 = vsel %vm276, %v476, %v478
        %v482 = vsel %vm276, %v478, %v480
        %485 = vst [vmem:[#allocation3 + $0x70] sm:$0xff] %v481
        %486 = vst [vmem:[#allocation3 + $0x78] sm:$0xff] %v482
        %v487 = vld [vmem:[#allocation2 + $0x8] sm:$0xff]
        %v488 = vld [vmem:[#allocation2 + $0x10] sm:$0xff]
        %v489 = vld [vmem:[#allocation2 + $0x18] sm:$0xff]
        %s490 = scalar_lea.vmem %s2, 16
        %v491 = vld [vmem:[%s490] ss:$8 sm:$0x3]
        %v493 = vperm.slane %v491, 0
        %v494 = vperm.slane %v491, 1
        %495 = vrot.lane.b32.xlu0 %v493, 17
        %v496 = vpop.permute.xlu0 %495
        %497 = vrot.lane.b32.xlu0 %v494, 17
        %v498 = vpop.permute.xlu0 %497
        %v499 = vsel %vm257, %v496, %v498
        %v503 = vmul.f32 %v487, %v496
        %v504 = vmul.f32 %v488, %v499
        %v505 = vmul.f32 %v489, %v498
        %509 = vrot.lane.b32.xlu0 %v503, 111
        %v510 = vpop.permute.xlu0 %509
        %511 = vrot.lane.b32.xlu0 %v504, 111
        %v512 = vpop.permute.xlu0 %511
        %513 = vrot.lane.b32.xlu0 %v505, 111
        %v514 = vpop.permute.xlu0 %513
        %v515 = vsel %vm240, %v510, %v512
        %v516 = vsel %vm240, %v512, %v514
        %519 = vst [vmem:[#allocation3 + $0x80] sm:$0xff] %v515
        %520 = vst [vmem:[#allocation3 + $0x88] sm:$0xff] %v516
      $region36: #{gconv_block_forward.1} parent=31 // pred_fallthru
        _
      %v521 = vld [vmem:[%s205] sm:$0xf]
      %v522 = vld [vmem:[%s205 + $0x4] sm:$0x3]
      %v523 = vld [vmem:[#allocation3] sm:$0xff]
      %v524 = vld [vmem:[#allocation3 + $0x8] sm:$0xff]
      %v525 = vld [vmem:[#allocation3 + $0x10] sm:$0xff]
      %v526 = vld [vmem:[#allocation3 + $0x18] sm:$0xff]
      %v527 = vld [vmem:[#allocation3 + $0x20] sm:$0xff]
      %v528 = vld [vmem:[#allocation3 + $0x28] sm:$0xff]
      %v529 = vld [vmem:[#allocation3 + $0x30] sm:$0xff]
      %v530 = vld [vmem:[#allocation3 + $0x38] sm:$0xff]
      %v531 = vld [vmem:[#allocation3 + $0x40] sm:$0xff]
      %v532 = vld [vmem:[#allocation3 + $0x48] sm:$0xff]
      %v533 = vld [vmem:[#allocation3 + $0x50] sm:$0xff]
      %v534 = vld [vmem:[#allocation3 + $0x58] sm:$0xff]
      %v535 = vld [vmem:[#allocation3 + $0x60] sm:$0xff]
      %v536 = vld [vmem:[#allocation3 + $0x68] sm:$0xff]
      %v537 = vld [vmem:[#allocation3 + $0x70] sm:$0xff]
      %v538 = vld [vmem:[#allocation3 + $0x78] sm:$0xff]
      %v539 = vld [vmem:[#allocation3 + $0x80] sm:$0xff]
      %v540 = vld [vmem:[#allocation3 + $0x88] sm:$0xff]
      %v541 = vpack.c.bf16 %v525, %v523
      %v542 = vpack.c.bf16 %v526, %v524
      %v543 = vpack.c.bf16 %v529, %v527
      %v544 = vpack.c.bf16 %v530, %v528
      %v545 = vpack.c.bf16 %v533, %v531
      %v546 = vpack.c.bf16 %v534, %v532
      %v547 = vpack.c.bf16 %v537, %v535
      %v548 = vpack.c.bf16 %v538, %v536
      %v549 = vpack.c.bf16 %v539, %v539
      %v550 = vpack.c.bf16 %v540, %v540
      %v553 = vunpack.c.l.b16 %v521
      %v554 = vunpack.c.l.b16 %v522
      %v555 = vpack.c.b16 %v554, %v553
      %vm556 = vcmask 588800
      %v558 = vsel %vm556, %v555, 0
      %vm560 = vcmask 1043456
      %v562 = vsel %vm560, %v549, 0
      %v565 = vsel %vm560, %v550, 0
      %567 = vmatpush.bf16.msra.mxu0 0
      %568 = vmatpush.bf16.msra.mxu0 0
      %569 = vmatpush.bf16.msra.mxu0 0
      %570 = vmatpush.bf16.msra.mxu0 %v562
      %571 = vmatpush.bf16.msra.mxu0 %v547
      %572 = vmatpush.bf16.msra.mxu0 %v545
      %573 = vmatpush.bf16.msra.mxu0 %v543
      %574 = vmatpush.bf16.msra.mxu0 %v541
      %575 = vmatmul.bf16.gmra.mxu0 %v558
      %v576 = vpop.f32.mrf.mxu0
      %v577 = vadd.f32 0.0, %v576
      %v578 = vpop.f32.mrf.mxu0
      %v579 = vadd.f32 0.0, %v578
      %580 = vdwg.mxu0
      %581 = vmatpush.bf16.msra.mxu0 0
      %582 = vmatpush.bf16.msra.mxu0 0
      %583 = vmatpush.bf16.msra.mxu0 0
      %584 = vmatpush.bf16.msra.mxu0 %v565
      %585 = vmatpush.bf16.msra.mxu0 %v548
      %586 = vmatpush.bf16.msra.mxu0 %v546
      %587 = vmatpush.bf16.msra.mxu0 %v544
      %588 = vmatpush.bf16.msra.mxu0 %v542
      %589 = vmatmul.bf16.gmra.mxu0 %v558
      %v590 = vpop.f32.mrf.mxu0
      %v591 = vadd.f32 0.0, %v590
      %v592 = vpop.f32.mrf.mxu0
      %v593 = vadd.f32 0.0, %v592
      %594 = vdwg.mxu0
      %595 = vst [vmem:[%s216] sm:$0xff] %v577
      %596 = vst [vmem:[%s216 + $0x8] sm:$0xff] %v591
      %597 = vst [vmem:[%s216 + $0x10] sm:$0xf] %v579
      %598 = vst [vmem:[%s216 + $0x18] sm:$0xf] %v593
      %s599 = smul.u32 2, %s19
      %p600 = scmp.lt.s32.totalorder %s18, 1
      %s601 = scalar_select %p600, %s18, 1
      %p602 = scmp.lt.s32.totalorder %s599, 1
      %s603 = scalar_select %p602, %s599, 1
      %s604 = smul.addr %s603, 2
      %s605 = smul.addr %s601, 4
      %s606 = sadd.s32 %s604, %s605
      %s607 = smul.addr %s606, 8
      %s608 = scalar_lea.vmem %s3, %s607
      // Predicated region
      $region37: #{gconv_block_forward.1} parent=31 // pred_check
        %p609 = pneg %p119
      $region38: #{gconv_block_forward.1} parent=31 // pred_check_branch
        %611 = sbr.rel (%p609) target = $region40
      $region39: #{gconv_block_forward.1} parent=31 // pred_region
        %s612 = smul.u32 2, %s19
      $region40: #{gconv_block_forward.1} parent=31 // pred_fallthru
        _
    $region32: #{gconv_block_forward.1} parent=5 // pred_fallthru
      _
    %p613 = scmp.le.s32.totalorder 2, %s9
    // Predicated region
    $region41: #{gconv_block_forward.1} parent=5 // pred_check
      %p614 = pneg %p613
    $region42: #{gconv_block_forward.1} parent=5 // pred_check_branch
      %616 = sbr.rel (%p614) target = $region44
    $region43: #{gconv_block_forward.1} parent=5 // pred_region
      %s617 = ssub.s32 %s9, 2
      // Predicated region
      $region45: #{gconv_block_forward.1} parent=43 // pred_check
        %p618 = pneg %p125
      $region46: #{gconv_block_forward.1} parent=43 // pred_check_branch
        %620 = sbr.rel (%p618) target = $region48
      $region47: #{gconv_block_forward.1} parent=43 // pred_region
        %s621 = smul.u32 2, %s21
        %p622 = scmp.lt.s32.totalorder %s20, 1
        %s623 = scalar_select %p622, %s20, 1
        %p624 = scmp.lt.s32.totalorder %s621, 1
        %s625 = scalar_select %p624, %s621, 1
        %s626 = smul.addr %s625, 2
        %s627 = smul.addr %s623, 4
        %s628 = sadd.s32 %s626, %s627
        %s629 = smul.addr %s628, 8
        %s630 = scalar_lea.vmem %s3, %s629
      $region48: #{gconv_block_forward.1} parent=43 // pred_fallthru
        _
    $region44: #{gconv_block_forward.1} parent=5 // pred_fallthru
      _
  $region6: #{gconv_block_forward.1} parent=0 // loop_footer
    %s13 = sadd.s32 1, %s9
  $region7: #{gconv_block_forward.1} parent=0 // loop_footer_branch
    %8 = sbr.rel target = $region3
  $region8: #{gconv_block_forward.1} parent=0 // loop_exit
    _

</llo_original>
